<compile_context>
chip_gen: v5e
topology: v5e:2x2
jax: 0.10.0
libtpu: 0.0.40
codegen_flags: <defaults>
</compile_context>

<pallas_src>
import functools

import jax
import jax.numpy as jnp
from jax import lax
from jax.experimental import pallas as pl
from jax.experimental.pallas import tpu as pltpu


_MAX_BLOCK_BYTES = 4 * 1024 * 1024     # per-block budget, in f32 working bytes
_VMEM_LIMIT_BYTES = 32 * 1024 * 1024   # explicit scoped-VMEM limit (safe on v5e/v6e/v7x)
_COMPUTE_ITEMSIZE = 4                  # budgeting uses the f32 working set


# --------------------------------------------------------------------------------------
# Tiling heuristics
# --------------------------------------------------------------------------------------
def _sublane_pack(dtype):
    """Native sublane packing for the input dtype (f32 -> 8, bf16 -> 16, int8/fp8 -> 32)."""
    return {4: 8, 2: 16, 1: 32}.get(jnp.dtype(dtype).itemsize, 8)


def _valid_cgs(C, sub):
    """Channel-group sizes dividing C that respect sublane packing (C itself always valid)."""
    cgs = {C}
    for c in range(sub, C, sub):
        if C % c == 0:
            cgs.add(c)
    return sorted(cgs)


def _pick_fused_cg(C, bytes_per_channel, sub, budget):
    """Largest channel group whose full (N, cg, HW) slab fits one block; prefer >=2 groups."""
    fits = [c for c in _valid_cgs(C, sub) if c * bytes_per_channel <= budget]
    if not fits:
        return None
    multi = [c for c in fits if C // c >= 2]
    return max(multi) if multi else max(fits)


def _pick_stream_cg(C, sub):
    """Channel group for the streaming path: <=128 sublanes, >=2 groups when C allows."""
    cands = [c for c in _valid_cgs(C, sub) if c <= 128]
    if not cands:
        cands = [min(_valid_cgs(C, sub))]
    best = max(cands)
    if C // best < 2:
        smaller = [c for c in cands if C // c >= 2]
        if smaller:
            best = max(smaller)   # keep both v7x TensorCores busy on the stats pass
    return best


def _pick_lane_tiles(HW, N, cg, budget):
    """Pick (tile_hw, nb, needs_mask) so nb*cg*tile_hw*4B ~ budget with lane-dense stores."""
    max_elems = max(budget // (_COMPUTE_ITEMSIZE * cg), 128)
    if HW <= max_elems:
        tile_hw = HW                       # full spatial extent -> no lane mask
        nb_cap = max(max_elems // HW, 1)   # pack several samples per block if HW is small
        nb = 1
        for d in range(1, min(N, nb_cap) + 1):
            if N % d == 0:
                nb = d
        return tile_hw, nb, False
    # HW larger than one block: tile the lane axis with a 128-aligned tile.
    best_div = 0
    t = 128
    while t <= max_elems:
        if HW % t == 0:
            best_div = t
        t += 128
    tile_masked = (max_elems // 128) * 128
    if best_div >= max(128, tile_masked // 2):
        return best_div, 1, False          # exact divisor: no ragged edge, unmasked stores
    return tile_masked, 1, True            # ragged edge tile, masked in pass 1


# --------------------------------------------------------------------------------------
# Kernels
# --------------------------------------------------------------------------------------
def _quantize(x, *, inv_step, step, qmin, qmax):
    return jnp.clip(jnp.round(x * inv_step), qmin, qmax) * step


def _channel_moments(x):
    """sum / sum-of-squares over (sample, lane) axes of an (nb, cg, t) block -> (1, cg, 1)."""
    s = jnp.sum(jnp.sum(x, axis=2, keepdims=True), axis=0, keepdims=True)
    sq = jnp.sum(jnp.sum(x * x, axis=2, keepdims=True), axis=0, keepdims=True)
    return s, sq


def _fused_kernel(x_ref, o_ref, *, inv_step, step, qmin, qmax, quantize, eps, inv_count):
    """Single pass: quantize + per-channel BN stats + normalize on one resident slab."""
    x = x_ref[...].astype(jnp.float32)                        # (N, cg, HW)
    if quantize:
        x = _quantize(x, inv_step=inv_step, step=step, qmin=qmin, qmax=qmax)
    s, sq = _channel_moments(x)                               # (1, cg, 1)
    mean = s * inv_count
    var = jnp.maximum(sq * inv_count - mean * mean, 0.0)      # clamp guards cancellation
    inv_std = lax.rsqrt(var + eps)                            # EUP rsqrt (free slot)
    o_ref[...] = ((x - mean) * inv_std).astype(o_ref.dtype)


def _stats_kernel(x_ref, sum_ref, sq_ref, *,
                  inv_step, step, qmin, qmax, quantize, hw, tile_hw, need_mask):
    """Pass 1: accumulate per-channel sum / sum-of-squares of quantized x."""
    @pl.when((pl.program_id(1) == 0) & (pl.program_id(2) == 0))
    def _init():
        sum_ref[...] = jnp.zeros_like(sum_ref)
        sq_ref[...] = jnp.zeros_like(sq_ref)

    x = x_ref[...].astype(jnp.float32)                        # (nb, cg, tile_hw)
    if need_mask:
        # Ragged last lane tile: zero out-of-bounds columns (padding is unspecified data).
        col = pl.program_id(2) * tile_hw + lax.broadcasted_iota(jnp.int32, x.shape, 2)
        x = jnp.where(col < hw, x, 0.0)
    if quantize:
        x = _quantize(x, inv_step=inv_step, step=step, qmin=qmin, qmax=qmax)
    s, sq = _channel_moments(x)                               # (1, cg, 1)
    sum_ref[...] += s[0]
    sq_ref[...] += sq[0]


def _normalize_kernel(x_ref, sum_ref, sq_ref, o_ref, *,
                      inv_step, step, qmin, qmax, quantize, eps, inv_count):
    """Pass 2: out = (quantize(x) - mean) * rsqrt(var + eps); per-channel math fused in."""
    x = x_ref[...].astype(jnp.float32)                        # (nb, cg, tile_hw)
    if quantize:
        x = _quantize(x, inv_step=inv_step, step=step, qmin=qmin, qmax=qmax)
    mean = sum_ref[...] * inv_count                           # (cg, 1)
    var = jnp.maximum(sq_ref[...] * inv_count - mean * mean, 0.0)
    inv_std = lax.rsqrt(var + eps)
    o_ref[...] = ((x - mean[None]) * inv_std[None]).astype(o_ref.dtype)


# --------------------------------------------------------------------------------------
# Wrapper
# --------------------------------------------------------------------------------------
def normalize2d_q(x_nchw, *, bits=8, eps=1e-5, step=2.0 ** (-5),
                  max_block_bytes=_MAX_BLOCK_BYTES):
    """Forward pass of Normalize2d_q. x_nchw: (N, C, H, W)."""
    N, C, H, W = x_nchw.shape
    HW = H * W
    x3 = x_nchw.reshape(N, C, HW)          # free reshape: NCHW is contiguous

    quantize = (bits != 32)
    qmin = -2.0 ** (bits - 1)
    qmax = 2.0 ** (bits - 1) - 1
    inv_step = 1.0 / step
    inv_count = 1.0 / float(N * HW)
    sub = _sublane_pack(x_nchw.dtype)
    qkw = dict(inv_step=inv_step, step=step, qmin=qmin, qmax=qmax, quantize=quantize)

    # ---- fused single-pass path (1R + 1W) when a whole channel-group slab fits a block ----
    fused_cg = _pick_fused_cg(C, N * HW * _COMPUTE_ITEMSIZE, sub, max_block_bytes)
    if fused_cg is not None:
        num_g = C // fused_cg
        slab_spec = pl.BlockSpec((N, fused_cg, HW), lambda g: (0, g, 0))
        out3 = pl.pallas_call(
            functools.partial(_fused_kernel, eps=eps, inv_count=inv_count, **qkw),
            out_shape=jax.ShapeDtypeStruct((N, C, HW), x_nchw.dtype),
            grid=(num_g,),
            in_specs=[slab_spec],
            out_specs=slab_spec,
            compiler_params=pltpu.CompilerParams(
                dimension_semantics=("parallel",),
                vmem_limit_bytes=_VMEM_LIMIT_BYTES),
        )(x3)
        return out3.reshape(N, C, H, W)

    # ---- streaming two-pass path (2R + 1W) -------------------------------------------------
    cg = _pick_stream_cg(C, sub)
    num_g = C // cg
    tile_hw, nb, need_mask = _pick_lane_tiles(HW, N, cg, max_block_bytes)
    num_n = N // nb
    num_t = pl.cdiv(HW, tile_hw)
    grid = (num_g, num_n, num_t)
    x_spec = pl.BlockSpec((nb, cg, tile_hw), lambda g, n, t: (n, g, t))
    ch_spec = pl.BlockSpec((cg, 1), lambda g, n, t: (g, 0))

    # pass 1: per-channel sum & sum-of-squares (accumulated across the n / t grid axes)
    psum, psq = pl.pallas_call(
        functools.partial(_stats_kernel, hw=HW, tile_hw=tile_hw, need_mask=need_mask, **qkw),
        out_shape=(jax.ShapeDtypeStruct((C, 1), jnp.float32),
                   jax.ShapeDtypeStruct((C, 1), jnp.float32)),
        grid=grid,
        in_specs=[x_spec],
        out_specs=(ch_spec, ch_spec),
        compiler_params=pltpu.CompilerParams(
            dimension_semantics=("parallel", "arbitrary", "arbitrary"),
            vmem_limit_bytes=_VMEM_LIMIT_BYTES),
    )(x3)

    # pass 2: normalize; mean / rsqrt folded into the kernel (no intermediate XLA op)
    out3 = pl.pallas_call(
        functools.partial(_normalize_kernel, eps=eps, inv_count=inv_count, **qkw),
        out_shape=jax.ShapeDtypeStruct((N, C, HW), x_nchw.dtype),
        grid=grid,
        in_specs=[x_spec, ch_spec, ch_spec],
        out_specs=x_spec,
        compiler_params=pltpu.CompilerParams(
            dimension_semantics=("parallel", "parallel", "parallel"),
            vmem_limit_bytes=_VMEM_LIMIT_BYTES),
    )(x3, psum, psq)

    return out3.reshape(N, C, H, W)


def _reference(x_nchw, *, bits=8, eps=1e-5, step=2.0 ** (-5)):
    """Pure-JAX reference for the same forward semantics."""
    x = x_nchw.astype(jnp.float32)
    if bits != 32:
        qmin = -2.0 ** (bits - 1)
        qmax = 2.0 ** (bits - 1) - 1
        x = jnp.clip(jnp.round(x / step), qmin, qmax) * step
    mean = jnp.mean(x, axis=(0, 2, 3), keepdims=True)
    var = jnp.mean((x - mean) ** 2, axis=(0, 2, 3), keepdims=True)
    return (x - mean) / jnp.sqrt(var + eps)


if __name__ == "__main__":
    key = jax.random.PRNGKey(0)
    N, C, H, W = 2, 4, 16, 16
    bits = 8
    x = jax.random.normal(key, (N, C, H, W), dtype=jnp.float32)

    # Default path (small shape -> fused single-pass kernel).
    out = jax.block_until_ready(normalize2d_q(x, bits=bits))
    ref = _reference(x, bits=bits)
    assert out.shape == (N, C, H, W)
    assert jnp.max(jnp.abs(out - ref)) < 1e-4, "fused path mismatch vs reference"

    # Force the streaming two-pass path (tiny per-block budget) on the same input.
    out2 = jax.block_until_ready(normalize2d_q(x, bits=bits, max_block_bytes=4096))
    assert jnp.max(jnp.abs(out2 - ref)) < 1e-4, "two-pass path mismatch vs reference"

    # Force the ragged lane-tile (masked) branch of the two-pass path.
    x_odd = jax.random.normal(jax.random.PRNGKey(1), (2, 4, 16, 18), dtype=jnp.float32)
    out3 = jax.block_until_ready(normalize2d_q(x_odd, bits=bits, max_block_bytes=4096))
    ref3 = _reference(x_odd, bits=bits)
    assert jnp.max(jnp.abs(out3 - ref3)) < 1e-4, "masked two-pass path mismatch vs reference"

    print("KERNEL_OK")
</pallas_src>

<mosaic_0001>
module attributes {stable_mosaic.version = 11 : i64} {
  func.func @_fused_kernel(%arg0: i32, %arg1: memref<2x4x256xf32, #tpu.memory_space<vmem>>, %arg2: memref<2x4x256xf32, #tpu.memory_space<vmem>>) attributes {dimension_semantics = [#tpu.dimension_semantics<parallel>], iteration_bounds = array<i64: 1>, scalar_prefetch = 0 : i64, scratch_operands = 0 : i64, tpu.core_type = #tpu.core_type<tc>, window_params = [{transform_indices = @transform_0, window_bounds = array<i64: 2, 4, 256>}, {transform_indices = @transform_1, window_bounds = array<i64: 2, 4, 256>}]} {
    %c0 = arith.constant 0 : index
    %c0_0 = arith.constant 0 : index
    %c0_1 = arith.constant 0 : index
    %0 = vector.load %arg1[%c0, %c0_0, %c0_1] : memref<2x4x256xf32, #tpu.memory_space<vmem>>, vector<2x4x256xf32>
    %cst = arith.constant 3.200000e+01 : f32
    %1 = vector.broadcast %cst : f32 to vector<2x4x256xf32>
    %2 = arith.mulf %0, %1 : vector<2x4x256xf32>
    %3 = math.roundeven %2 : vector<2x4x256xf32>
    %cst_2 = arith.constant -1.280000e+02 : f32
    %cst_3 = arith.constant 1.270000e+02 : f32
    %4 = vector.broadcast %cst_2 : f32 to vector<2x4x256xf32>
    %5 = arith.maximumf %4, %3 : vector<2x4x256xf32>
    %6 = vector.broadcast %cst_3 : f32 to vector<2x4x256xf32>
    %7 = arith.minimumf %6, %5 : vector<2x4x256xf32>
    %cst_4 = arith.constant 3.125000e-02 : f32
    %8 = vector.broadcast %cst_4 : f32 to vector<2x4x256xf32>
    %9 = arith.mulf %7, %8 : vector<2x4x256xf32>
    %cst_5 = arith.constant dense<0.000000e+00> : vector<2x4xf32>
    %10 = vector.multi_reduction <add>, %9, %cst_5 [2] : vector<2x4x256xf32> to vector<2x4xf32>
    %11 = vector.shape_cast %10 : vector<2x4xf32> to vector<2x4x1xf32>
    %cst_6 = arith.constant dense<0.000000e+00> : vector<4x1xf32>
    %12 = vector.multi_reduction <add>, %11, %cst_6 [0] : vector<2x4x1xf32> to vector<4x1xf32>
    %13 = vector.shape_cast %12 : vector<4x1xf32> to vector<1x4x1xf32>
    %14 = arith.mulf %9, %9 : vector<2x4x256xf32>
    %cst_7 = arith.constant dense<0.000000e+00> : vector<2x4xf32>
    %15 = vector.multi_reduction <add>, %14, %cst_7 [2] : vector<2x4x256xf32> to vector<2x4xf32>
    %16 = vector.shape_cast %15 : vector<2x4xf32> to vector<2x4x1xf32>
    %cst_8 = arith.constant dense<0.000000e+00> : vector<4x1xf32>
    %17 = vector.multi_reduction <add>, %16, %cst_8 [0] : vector<2x4x1xf32> to vector<4x1xf32>
    %18 = vector.shape_cast %17 : vector<4x1xf32> to vector<1x4x1xf32>
    %cst_9 = arith.constant 0.001953125 : f32
    %19 = vector.broadcast %cst_9 : f32 to vector<1x4x1xf32>
    %20 = arith.mulf %13, %19 : vector<1x4x1xf32>
    %cst_10 = arith.constant 0.001953125 : f32
    %21 = vector.broadcast %cst_10 : f32 to vector<1x4x1xf32>
    %22 = arith.mulf %18, %21 : vector<1x4x1xf32>
    %23 = arith.mulf %20, %20 : vector<1x4x1xf32>
    %24 = arith.subf %22, %23 : vector<1x4x1xf32>
    %cst_11 = arith.constant 0.000000e+00 : f32
    %25 = vector.broadcast %cst_11 : f32 to vector<1x4x1xf32>
    %26 = arith.maximumf %24, %25 : vector<1x4x1xf32>
    %cst_12 = arith.constant 9.99999974E-6 : f32
    %27 = vector.broadcast %cst_12 : f32 to vector<1x4x1xf32>
    %28 = arith.addf %26, %27 : vector<1x4x1xf32>
    %29 = math.rsqrt %28 : vector<1x4x1xf32>
    %30 = vector.broadcast %20 : vector<1x4x1xf32> to vector<2x4x256xf32>
    %31 = arith.subf %9, %30 : vector<2x4x256xf32>
    %32 = vector.broadcast %29 : vector<1x4x1xf32> to vector<2x4x256xf32>
    %33 = arith.mulf %31, %32 : vector<2x4x256xf32>
    %c0_13 = arith.constant 0 : index
    %c0_14 = arith.constant 0 : index
    %c0_15 = arith.constant 0 : index
    %34 = vector.load %arg2[%c0_13, %c0_14, %c0_15] : memref<2x4x256xf32, #tpu.memory_space<vmem>>, vector<2x4x256xf32>
    tpu.vector_store %arg2[%c0_13, %c0_14, %c0_15], %33 {strides = array<i32>} : memref<2x4x256xf32, #tpu.memory_space<vmem>>, vector<2x4x256xf32>,
    return
  }
  func.func @transform_0(%arg0: i32) -> (i32, i32, i32) {
    %c0_i32 = arith.constant 0 : i32
    %c0_i32_0 = arith.constant 0 : i32
    %c0_i32_1 = arith.constant 0 : i32
    return %c0_i32, %arg0, %c0_i32_0 : i32, i32, i32
  }
  func.func @transform_1(%arg0: i32) -> (i32, i32, i32) {
    %c0_i32 = arith.constant 0 : i32
    %c0_i32_0 = arith.constant 0 : i32
    %c0_i32_1 = arith.constant 0 : i32
    return %c0_i32, %arg0, %c0_i32_0 : i32, i32, i32
  }
}

</mosaic_0001>

<llo_original>
// kernel: tpu_custom_call.1
$region0: #{tpu_custom_call.1}
  #allocation0 [shape = 'u32[]', space=smem, size = 0x4, offset = 0x4, fixed_abs, tag = 'smem constant byte address 0x4 - core index']
  #allocation1 [shape = 'u32[72,128]{1,0:T(1,128)}', space=vmem, size = 0x9000, scoped, tag = 'internal scratch']
  %s0 = inlined_call_operand.hbm [shape: f32[2,4,256], index: 0, kind: input, shape index: {}]
  %s1 = inlined_call_operand.hbm [shape: f32[2,4,256], index: 1, kind: output, shape index: {}]
  %s2 = sld [smem:[#allocation0]]
  $region18: #{tpu_custom_call.1} parent=0
    _
  %s4 = ssub.s32 1, %s2
  %s5 = scalar_select 0, %s4, %s2
  $region1: #{tpu_custom_call.1} parent=0
    #allocation2 [shape = 'u8[8192]{0}', space=vmem, size = 0x2000, scoped, tag = 'input window, operand 0, single buffered']
    #allocation3 [shape = 's32[1]{0}', space=sflag, size = 0x4, scoped, tag = 'scoped memory for tpu_custom_call.1']
    #allocation4 [shape = 's32[1]{0}', space=sflag, size = 0x4, scoped, tag = 'scoped memory for tpu_custom_call.1']
    #allocation5 [shape = 'u8[8192]{0}', space=vmem, size = 0x2000, scoped, tag = 'output window, operand 0, single buffered']
    %6 = vsyncpa [#allocation3], 0
    %7 = vsyncpa [#allocation4], 0
    // Predicated region
    $region2: #{tpu_custom_call.1} parent=1 // pred_check
      _
    $region3: #{tpu_custom_call.1} parent=1 // pred_check_branch
      %9 = sbr.rel (0) target = $region5
    $region4: #{tpu_custom_call.1} parent=1 // pred_region
      %11 = vsyncadd [#allocation3], 0
      %s12 = sshll.u32 %s0, 4
      %s13 = int_to_ptr.hbm [resolvable:$true] %s12
      %s14 = sshll.u32 [#allocation2], 4
      %s15 = int_to_ptr.vmem [resolvable:$true] %s14
      %20 = dma.hbm_to_vmem [thread:$0]  %s13, 256, %s15, [#allocation3], 128, 128, 8
    $region5: #{tpu_custom_call.1} parent=1 // pred_fallthru
      _
    // Predicated region
    $region6: #{tpu_custom_call.1} parent=1 // pred_check
      _
    $region7: #{tpu_custom_call.1} parent=1 // pred_check_branch
      %22 = sbr.rel (0) target = $region9
    $region8: #{tpu_custom_call.1} parent=1 // pred_region
      %24 = dma.done [#allocation3], 256
    $region9: #{tpu_custom_call.1} parent=1 // pred_fallthru
      _
    %v25 = vld [vmem:[#allocation2] sm:$0xff]
    %v26 = vld [vmem:[#allocation2 + $0x8] sm:$0xff]
    %v27 = vmul.f32 %v25, 32.0
    %v28 = vmul.f32 %v26, 32.0
    %v29 = vround.ne.pseudo %v27
    %v30 = vround.ne.pseudo %v28
    %v31 = vmax.f32 %v29, -128.0
    %v32 = vmax.f32 %v30, -128.0
    %v33 = vmin.f32 %v31, 127.0
    %v34 = vmin.f32 %v32, 127.0
    %v35 = vmul.f32 %v33, 0.03125
    %v36 = vmul.f32 %v34, 0.03125
    %39 = vst [vmem:[#allocation1] ss:$2 sm:$0xff] %v35
    %v40 = vld.sshfl [vmem:[#allocation1] sm:$0xff pattern:$0x75316420]
    %v41 = vld.sshfl [vmem:[#allocation1 + $0x8] sm:$0xff pattern:$0x75316420]
    %s42 = scalar_lea.vmem [#allocation1], 16
    %43 = vst [vmem:[%s42] ss:$2 sm:$0xff] %v36
    %v44 = vld.sshfl [vmem:[#allocation1 + $0x10] sm:$0xff pattern:$0x75316420]
    %v45 = vld.sshfl [vmem:[#allocation1 + $0x18] sm:$0xff pattern:$0x75316420]
    %vm50 = vcmask 1043456
    %v51 = vsel %vm50, %v40, 0.0
    %v52 = vsel %vm50, %v41, 0.0
    %v53 = vadd.f32 %v51, %v52
    %54 = vadd.xlane.f32.xlu0 %v53
    %v55 = vpop.xlane.xlu0 %54
    %v56 = vsel %vm50, %v44, 0.0
    %v57 = vsel %vm50, %v45, 0.0
    %v58 = vadd.f32 %v56, %v57
    %59 = vadd.xlane.f32.xlu0 %v58
    %v60 = vpop.xlane.xlu0 %59
    %v61 = vsel %vm50, %v55, 0.0
    %v62 = vsel %vm50, %v60, 0.0
    %v63 = vadd.f32 %v61, %v62
    %v64 = vmul.f32 %v35, %v35
    %v65 = vmul.f32 %v36, %v36
    %68 = vst [vmem:[#allocation1] ss:$2 sm:$0xff] %v64
    %v69 = vld.sshfl [vmem:[#allocation1] sm:$0xff pattern:$0x75316420]
    %v70 = vld.sshfl [vmem:[#allocation1 + $0x8] sm:$0xff pattern:$0x75316420]
    %s71 = scalar_lea.vmem [#allocation1], 16
    %72 = vst [vmem:[%s71] ss:$2 sm:$0xff] %v65
    %v73 = vld.sshfl [vmem:[#allocation1 + $0x10] sm:$0xff pattern:$0x75316420]
    %v74 = vld.sshfl [vmem:[#allocation1 + $0x18] sm:$0xff pattern:$0x75316420]
    %v79 = vsel %vm50, %v69, 0.0
    %v80 = vsel %vm50, %v70, 0.0
    %v81 = vadd.f32 %v79, %v80
    %82 = vadd.xlane.f32.xlu0 %v81
    %v83 = vpop.xlane.xlu0 %82
    %v84 = vsel %vm50, %v73, 0.0
    %v85 = vsel %vm50, %v74, 0.0
    %v86 = vadd.f32 %v84, %v85
    %87 = vadd.xlane.f32.xlu0 %v86
    %v88 = vpop.xlane.xlu0 %87
    %v89 = vsel %vm50, %v83, 0.0
    %v90 = vsel %vm50, %v88, 0.0
    %v91 = vadd.f32 %v89, %v90
    %v92 = vmul.f32 %v63, 0.001953125
    %v93 = vmul.f32 %v91, 0.001953125
    %v94 = vmul.f32 %v92, %v92
    %v95 = vsub.f32 %v93, %v94
    %v96 = vmax.f32 %v95, 0.0
    %v97 = vadd.f32 %v96, 1e-05
    %v98 = vrsqrt.pop %v97
    %v99 = vmul.f32 %v98, %v97
    %v100 = vmul.f32 %v99, %v98
    %v101 = vmul.f32 0.5, %v100
    %v102 = vsub.f32 1.5, %v101
    %v103 = vmul.f32 %v98, %v102
    %vm104 = vweird.f32 %v97
    %vm105 = vweird.f32 %v98
    %vm106 = vmor %vm104, %vm105
    %v107 = vsel %vm106, %v98, %v103
    %v110 = vunpack.c.l.s4 839922192
    %v111 = vunpack.c.0.s8 %v110
    %v112 = vperm.slane %v92, %v111
    %v114 = vsub.f32 %v35, %v112
    %v115 = vsub.f32 %v36, %v112
    %v118 = vunpack.c.l.s4 839922192
    %v119 = vunpack.c.0.s8 %v118
    %v120 = vperm.slane %v107, %v119
    %v122 = vmul.f32 %v114, %v120
    %v123 = vmul.f32 %v115, %v120
    %124 = vst [vmem:[#allocation5] sm:$0xff] %v122
    %125 = vst [vmem:[#allocation5 + $0x8] sm:$0xff] %v123
    // Predicated region
    $region10: #{tpu_custom_call.1} parent=1 // pred_check
      _
    $region11: #{tpu_custom_call.1} parent=1 // pred_check_branch
      %127 = sbr.rel (0) target = $region13
    $region12: #{tpu_custom_call.1} parent=1 // pred_region
      %129 = vsyncadd [#allocation4], 0
      %s130 = sshll.u32 [#allocation5], 4
      %s131 = int_to_ptr.vmem [resolvable:$true] %s130
      %s132 = sshll.u32 %s1, 4
      %s133 = int_to_ptr.hbm [resolvable:$true] %s132
      %138 = dma.vmem_to_hbm [thread:$0]  %s131, 256, %s133, [#allocation4], 128, 128, 8
    $region13: #{tpu_custom_call.1} parent=1 // pred_fallthru
      _
    // Predicated region
    $region14: #{tpu_custom_call.1} parent=1 // pred_check
      _
    $region15: #{tpu_custom_call.1} parent=1 // pred_check_branch
      %140 = sbr.rel (0) target = $region17
    $region16: #{tpu_custom_call.1} parent=1 // pred_region
      %142 = dma.done [#allocation4], 256
    $region17: #{tpu_custom_call.1} parent=1 // pred_fallthru
      _
    %143 = vsyncpa [#allocation3], 1
    %144 = vsyncpa [#allocation4], 1

</llo_original>
